<compile_context>
chip_gen: v7x
topology: tpu7x:2x2x1
jax: 0.10.0
libtpu: 0.0.40
codegen_flags: <defaults>
</compile_context>

<pallas_src>
import functools

import jax
import jax.numpy as jnp
from jax.experimental import pallas as pl
from jax.experimental.pallas import tpu as pltpu


NUM_CLASSES = 200      # CUB birds
BN_EPS = 1e-3          # matches BasicConv2d's BatchNorm2d(eps=0.001)


def _round_up(v, m):
    return (v + m - 1) // m * m


# ----------------------------------------------------------------------------
# Core Pallas kernel: (M, K) @ (K, Cout) -> * scale + shift -> [ReLU]
# bf16 operands on the MXU, f32 accumulation, fused folded-BatchNorm affine.
# ----------------------------------------------------------------------------
def _mm_scale_act_kernel(x_ref, w_ref, s_ref, b_ref, o_ref, *, relu):
    acc = jnp.dot(x_ref[...], w_ref[...], preferred_element_type=jnp.float32)
    y = acc * s_ref[...] + b_ref[...]
    if relu:
        y = jnp.maximum(y, 0.0)
    o_ref[...] = y.astype(o_ref.dtype)


def _matmul_scale_act(x2, wmat, scale, shift, *, relu, out_dtype):
    """x2: (M, K); wmat: (K, Cout); scale/shift: (Cout,) f32 -> (M, Cout)."""
    m, k = x2.shape
    cout = wmat.shape[1]
    tm = min(512, _round_up(m, 16))          # M tile (rows), multiple of 16
    mp = _round_up(m, tm)
    if mp != m:
        x2 = jnp.pad(x2, ((0, mp - m), (0, 0)))
    out = pl.pallas_call(
        functools.partial(_mm_scale_act_kernel, relu=relu),
        out_shape=jax.ShapeDtypeStruct((mp, cout), out_dtype),
        grid=(mp // tm,),
        in_specs=[
            pl.BlockSpec((tm, k), lambda i: (i, 0)),       # activations tile
            pl.BlockSpec((k, cout), lambda i: (0, 0)),     # whole weight
            pl.BlockSpec((1, cout), lambda i: (0, 0)),     # folded BN scale
            pl.BlockSpec((1, cout), lambda i: (0, 0)),     # folded BN shift
        ],
        out_specs=pl.BlockSpec((tm, cout), lambda i: (i, 0)),
        compiler_params=pltpu.CompilerParams(
            dimension_semantics=("parallel",),
            vmem_limit_bytes=48 * 1024 * 1024),
    )(x2, wmat, scale.reshape(1, cout), shift.reshape(1, cout))
    return out[:m] if mp != m else out


# ----------------------------------------------------------------------------
# BasicConv2d: conv(bias=False) -> BatchNorm(eval, folded into scale/shift)
#              -> ReLU, all fused into the Pallas matmul kernel above.
# ----------------------------------------------------------------------------
def conv_bn_relu(x, w, scale, shift, *, stride=(1, 1), padding=(0, 0)):
    """x: (N,H,W,Cin) bf16; w: (kh,kw,Cin,Cout) bf16; scale/shift: (Cout,) f32."""
    kh, kw, cin, cout = w.shape
    sh, sw = stride
    ph, pw = padding
    if ph or pw:
        x = jnp.pad(x, ((0, 0), (ph, ph), (pw, pw), (0, 0)))
    n, h_pad, w_pad, _ = x.shape
    ho = (h_pad - kh) // sh + 1
    wo = (w_pad - kw) // sw + 1

    if kh == 1 and kw == 1 and sh == 1 and sw == 1:
        patches = x                                   # no im2col for 1x1 convs
        kdim = cin
    else:
        slabs = [x[:, dy:dy + sh * (ho - 1) + 1:sh,
                   dx:dx + sw * (wo - 1) + 1:sw, :]
                 for dy in range(kh) for dx in range(kw)]
        patches = jnp.concatenate(slabs, axis=-1)     # (N, Ho, Wo, kh*kw*Cin)
        kdim = kh * kw * cin

    x2 = patches.reshape(n * ho * wo, kdim)
    wmat = w.reshape(kdim, cout)                      # (dy, dx, ci) order == slabs
    y = _matmul_scale_act(x2, wmat, scale, shift, relu=True,
                          out_dtype=jnp.bfloat16)
    return y.reshape(n, ho, wo, cout)


def _bconv(p, x, stride=(1, 1), pad=(0, 0)):
    return conv_bn_relu(x, p["w"], p["scale"], p["shift"],
                        stride=stride, padding=pad)


# ----------------------------------------------------------------------------
# Pooling glue (data movement only; XLA handles these).
# ----------------------------------------------------------------------------
def _max_pool_3x3_s2(x):
    n, h, w, c = x.shape
    ho = (h - 3) // 2 + 1
    wo = (w - 3) // 2 + 1
    out = None
    for dy in range(3):
        for dx in range(3):
            s = x[:, dy:dy + 2 * (ho - 1) + 1:2, dx:dx + 2 * (wo - 1) + 1:2, :]
            out = s if out is None else jnp.maximum(out, s)
    return out


def _avg_pool_3x3_s1_p1(x):
    # F.avg_pool2d(kernel=3, stride=1, padding=1), count_include_pad=True -> /9
    n, h, w, c = x.shape
    xp = jnp.pad(x.astype(jnp.float32), ((0, 0), (1, 1), (1, 1), (0, 0)))
    acc = jnp.zeros((n, h, w, c), jnp.float32)
    for dy in range(3):
        for dx in range(3):
            acc = acc + xp[:, dy:dy + h, dx:dx + w, :]
    return (acc * (1.0 / 9.0)).astype(x.dtype)


# ----------------------------------------------------------------------------
# Inception blocks (forward).  Channel concat order matches torch.cat(.., 1).
# ----------------------------------------------------------------------------
def _inception_a(p, x):
    b1 = _bconv(p["b1x1"], x)
    b5 = _bconv(p["b5_1"], x)
    b5 = _bconv(p["b5_2"], b5, pad=(2, 2))
    bd = _bconv(p["bd_1"], x)
    bd = _bconv(p["bd_2"], bd, pad=(1, 1))
    bd = _bconv(p["bd_3"], bd, pad=(1, 1))
    bp = _avg_pool_3x3_s1_p1(x)
    bp = _bconv(p["bp"], bp)
    return jnp.concatenate([b1, b5, bd, bp], axis=-1)


def _inception_b(p, x):
    b3 = _bconv(p["b3"], x, stride=(2, 2))
    bd = _bconv(p["bd_1"], x)
    bd = _bconv(p["bd_2"], bd, pad=(1, 1))
    bd = _bconv(p["bd_3"], bd, stride=(2, 2))
    bp = _max_pool_3x3_s2(x)
    return jnp.concatenate([b3, bd, bp], axis=-1)


def _inception_c(p, x):
    b1 = _bconv(p["b1x1"], x)
    b7 = _bconv(p["b7_1"], x)
    b7 = _bconv(p["b7_2"], b7, pad=(0, 3))     # (1,7)
    b7 = _bconv(p["b7_3"], b7, pad=(3, 0))     # (7,1)
    bd = _bconv(p["bd_1"], x)
    bd = _bconv(p["bd_2"], bd, pad=(3, 0))     # (7,1)
    bd = _bconv(p["bd_3"], bd, pad=(0, 3))     # (1,7)
    bd = _bconv(p["bd_4"], bd, pad=(3, 0))     # (7,1)
    bd = _bconv(p["bd_5"], bd, pad=(0, 3))     # (1,7)
    bp = _avg_pool_3x3_s1_p1(x)
    bp = _bconv(p["bp"], bp)
    return jnp.concatenate([b1, b7, bd, bp], axis=-1)


def _inception_d(p, x):
    b3 = _bconv(p["b3_1"], x)
    b3 = _bconv(p["b3_2"], b3, stride=(2, 2))
    b7 = _bconv(p["b7_1"], x)
    b7 = _bconv(p["b7_2"], b7, pad=(0, 3))     # (1,7)
    b7 = _bconv(p["b7_3"], b7, pad=(3, 0))     # (7,1)
    b7 = _bconv(p["b7_4"], b7, stride=(2, 2))
    bp = _max_pool_3x3_s2(x)
    return jnp.concatenate([b3, b7, bp], axis=-1)


def _inception_e(p, x):
    b1 = _bconv(p["b1x1"], x)
    b3 = _bconv(p["b3_1"], x)
    b3a = _bconv(p["b3_2a"], b3, pad=(0, 1))   # (1,3)
    b3b = _bconv(p["b3_2b"], b3, pad=(1, 0))   # (3,1)
    b3 = jnp.concatenate([b3a, b3b], axis=-1)
    bd = _bconv(p["bd_1"], x)
    bd = _bconv(p["bd_2"], bd, pad=(1, 1))
    bda = _bconv(p["bd_3a"], bd, pad=(0, 1))   # (1,3)
    bdb = _bconv(p["bd_3b"], bd, pad=(1, 0))   # (3,1)
    bd = jnp.concatenate([bda, bdb], axis=-1)
    bp = _avg_pool_3x3_s1_p1(x)
    bp = _bconv(p["bp"], bp)
    return jnp.concatenate([b1, b3, bd, bp], axis=-1)


# ----------------------------------------------------------------------------
# Full forward (eval mode).
# ----------------------------------------------------------------------------
def inception3_forward(params, x_nchw):
    """x_nchw: (N, 3, H, W) f32 -> list [ (N, num_classes) f32 ]."""
    # transform_input=False (default) -> no channel renormalization.
    x = jnp.transpose(x_nchw, (0, 2, 3, 1)).astype(jnp.bfloat16)   # NCHW->NHWC
    x = _bconv(params["Conv2d_1a_3x3"], x, stride=(2, 2))
    x = _bconv(params["Conv2d_2a_3x3"], x)
    x = _bconv(params["Conv2d_2b_3x3"], x, pad=(1, 1))
    x = _max_pool_3x3_s2(x)
    x = _bconv(params["Conv2d_3b_1x1"], x)
    x = _bconv(params["Conv2d_4a_3x3"], x)
    x = _max_pool_3x3_s2(x)
    x = _inception_a(params["Mixed_5b"], x)
    x = _inception_a(params["Mixed_5c"], x)
    x = _inception_a(params["Mixed_5d"], x)
    x = _inception_b(params["Mixed_6a"], x)
    x = _inception_c(params["Mixed_6b"], x)
    x = _inception_c(params["Mixed_6c"], x)
    x = _inception_c(params["Mixed_6d"], x)
    x = _inception_c(params["Mixed_6e"], x)
    # TODO(synk): AuxLogits branch is training-only; eval forward skips it.
    x = _inception_d(params["Mixed_7a"], x)
    x = _inception_e(params["Mixed_7b"], x)
    x = _inception_e(params["Mixed_7c"], x)

    # adaptive_avg_pool2d((1,1)) + flatten (channel order matches torch since
    # the spatial dims collapse to 1x1); dropout(training=False) is identity.
    feat = jnp.mean(x.astype(jnp.float32), axis=(1, 2))            # (N, 2048)

    fcw, fcb = params["fc_w"], params["fc_b"]
    ones = jnp.ones((fcw.shape[1],), jnp.float32)
    logits = _matmul_scale_act(feat.astype(jnp.bfloat16), fcw, ones, fcb,
                               relu=False, out_dtype=jnp.float32)
    return [logits]


# ----------------------------------------------------------------------------
# Synthetic, deterministic parameter init (BatchNorm folded to scale/shift).
# ----------------------------------------------------------------------------
def _conv_bn_params(key, cin, cout, kh, kw):
    ks = jax.random.split(key, 5)
    fan_in = kh * kw * cin
    w = jax.random.truncated_normal(ks[0], -2.0, 2.0, (kh, kw, cin, cout),
                                    jnp.float32) * (2.0 / fan_in) ** 0.5
    gamma = 1.0 + 0.1 * jax.random.normal(ks[1], (cout,), jnp.float32)
    beta = 0.05 * jax.random.normal(ks[2], (cout,), jnp.float32)
    rmean = 0.05 * jax.random.normal(ks[3], (cout,), jnp.float32)
    rvar = 1.0 + 0.1 * jnp.abs(jax.random.normal(ks[4], (cout,), jnp.float32))
    scale = gamma / jnp.sqrt(rvar + BN_EPS)
    shift = beta - rmean * scale
    return {"w": w.astype(jnp.bfloat16), "scale": scale, "shift": shift}


def _init_inception_a(key, cin, pool_features):
    k = jax.random.split(key, 7)
    return {"b1x1": _conv_bn_params(k[0], cin, 64, 1, 1),
            "b5_1": _conv_bn_params(k[1], cin, 48, 1, 1),
            "b5_2": _conv_bn_params(k[2], 48, 64, 5, 5),
            "bd_1": _conv_bn_params(k[3], cin, 64, 1, 1),
            "bd_2": _conv_bn_params(k[4], 64, 96, 3, 3),
            "bd_3": _conv_bn_params(k[5], 96, 96, 3, 3),
            "bp": _conv_bn_params(k[6], cin, pool_features, 1, 1)}


def _init_inception_b(key, cin):
    k = jax.random.split(key, 4)
    return {"b3": _conv_bn_params(k[0], cin, 384, 3, 3),
            "bd_1": _conv_bn_params(k[1], cin, 64, 1, 1),
            "bd_2": _conv_bn_params(k[2], 64, 96, 3, 3),
            "bd_3": _conv_bn_params(k[3], 96, 96, 3, 3)}


def _init_inception_c(key, cin, c7):
    k = jax.random.split(key, 10)
    return {"b1x1": _conv_bn_params(k[0], cin, 192, 1, 1),
            "b7_1": _conv_bn_params(k[1], cin, c7, 1, 1),
            "b7_2": _conv_bn_params(k[2], c7, c7, 1, 7),
            "b7_3": _conv_bn_params(k[3], c7, 192, 7, 1),
            "bd_1": _conv_bn_params(k[4], cin, c7, 1, 1),
            "bd_2": _conv_bn_params(k[5], c7, c7, 7, 1),
            "bd_3": _conv_bn_params(k[6], c7, c7, 1, 7),
            "bd_4": _conv_bn_params(k[7], c7, c7, 7, 1),
            "bd_5": _conv_bn_params(k[8], c7, 192, 1, 7),
            "bp": _conv_bn_params(k[9], cin, 192, 1, 1)}


def _init_inception_d(key, cin):
    k = jax.random.split(key, 6)
    return {"b3_1": _conv_bn_params(k[0], cin, 192, 1, 1),
            "b3_2": _conv_bn_params(k[1], 192, 320, 3, 3),
            "b7_1": _conv_bn_params(k[2], cin, 192, 1, 1),
            "b7_2": _conv_bn_params(k[3], 192, 192, 1, 7),
            "b7_3": _conv_bn_params(k[4], 192, 192, 7, 1),
            "b7_4": _conv_bn_params(k[5], 192, 192, 3, 3)}


def _init_inception_e(key, cin):
    k = jax.random.split(key, 9)
    return {"b1x1": _conv_bn_params(k[0], cin, 320, 1, 1),
            "b3_1": _conv_bn_params(k[1], cin, 384, 1, 1),
            "b3_2a": _conv_bn_params(k[2], 384, 384, 1, 3),
            "b3_2b": _conv_bn_params(k[3], 384, 384, 3, 1),
            "bd_1": _conv_bn_params(k[4], cin, 448, 1, 1),
            "bd_2": _conv_bn_params(k[5], 448, 384, 3, 3),
            "bd_3a": _conv_bn_params(k[6], 384, 384, 1, 3),
            "bd_3b": _conv_bn_params(k[7], 384, 384, 3, 1),
            "bp": _conv_bn_params(k[8], cin, 192, 1, 1)}


def init_params(key, num_classes=NUM_CLASSES):
    keys = jax.random.split(key, 17)
    p = {}
    p["Conv2d_1a_3x3"] = _conv_bn_params(keys[0], 3, 32, 3, 3)
    p["Conv2d_2a_3x3"] = _conv_bn_params(keys[1], 32, 32, 3, 3)
    p["Conv2d_2b_3x3"] = _conv_bn_params(keys[2], 32, 64, 3, 3)
    p["Conv2d_3b_1x1"] = _conv_bn_params(keys[3], 64, 80, 1, 1)
    p["Conv2d_4a_3x3"] = _conv_bn_params(keys[4], 80, 192, 3, 3)
    p["Mixed_5b"] = _init_inception_a(keys[5], 192, 32)
    p["Mixed_5c"] = _init_inception_a(keys[6], 256, 64)
    p["Mixed_5d"] = _init_inception_a(keys[7], 288, 64)
    p["Mixed_6a"] = _init_inception_b(keys[8], 288)
    p["Mixed_6b"] = _init_inception_c(keys[9], 768, 128)
    p["Mixed_6c"] = _init_inception_c(keys[10], 768, 160)
    p["Mixed_6d"] = _init_inception_c(keys[11], 768, 160)
    p["Mixed_6e"] = _init_inception_c(keys[12], 768, 192)
    p["Mixed_7a"] = _init_inception_d(keys[13], 768)
    p["Mixed_7b"] = _init_inception_e(keys[14], 1280)
    p["Mixed_7c"] = _init_inception_e(keys[15], 2048)
    kf1, kf2 = jax.random.split(keys[16])
    fcw = jax.random.truncated_normal(kf1, -2.0, 2.0, (2048, num_classes),
                                      jnp.float32) * (1.0 / 2048.0) ** 0.5
    fcb = 0.01 * jax.random.normal(kf2, (num_classes,), jnp.float32)
    p["fc_w"] = fcw.astype(jnp.bfloat16)
    p["fc_b"] = fcb
    return p


if __name__ == "__main__":
    root = jax.random.PRNGKey(0)
    k_test, k_x, k_p = jax.random.split(root, 3)

    # --- small self-check of the fused conv kernel against lax.conv ----------
    kt1, kt2, kt3, kt4 = jax.random.split(k_test, 4)
    xt = jax.random.normal(kt1, (2, 11, 11, 8), jnp.float32).astype(jnp.bfloat16)
    wt = (0.1 * jax.random.normal(kt2, (3, 3, 8, 16), jnp.float32)).astype(jnp.bfloat16)
    st = 1.0 + 0.1 * jax.random.normal(kt3, (16,), jnp.float32)
    bt = 0.1 * jax.random.normal(kt4, (16,), jnp.float32)
    got = conv_bn_relu(xt, wt, st, bt, stride=(2, 2), padding=(1, 1))
    ref = jax.lax.conv_general_dilated(
        xt.astype(jnp.float32), wt.astype(jnp.float32),
        window_strides=(2, 2), padding=((1, 1), (1, 1)),
        dimension_numbers=("NHWC", "HWIO", "NHWC"))
    ref = jnp.maximum(ref * st + bt, 0.0)
    assert jnp.allclose(got.astype(jnp.float32), ref, atol=5e-2, rtol=5e-2)

    # --- full Inception3 forward (eval) --------------------------------------
    # 75x75 is the smallest spatial input that survives the stride-2 stem and
    # the Mixed_6a / Mixed_7a reductions (75->37->35->17->15->7->3->1).
    x = jax.random.normal(k_x, (2, 3, 75, 75), jnp.float32)
    params = init_params(k_p, num_classes=NUM_CLASSES)

    fwd = jax.jit(inception3_forward)
    out = fwd(params, x)
    out = [jax.block_until_ready(o) for o in out]

    assert len(out) == 1
    assert out[0].shape == (2, NUM_CLASSES) and out[0].dtype == jnp.float32
    assert bool(jnp.all(jnp.isfinite(out[0])))
    print("KERNEL_OK")
</pallas_src>

<mosaic_0001>
module attributes {stable_mosaic.version = 11 : i64} {
  func.func @_mm_scale_act_kernel(%arg0: i32, %arg1: memref<80x72xbf16, #tpu.memory_space<vmem>>, %arg2: memref<72x16xbf16, #tpu.memory_space<vmem>>, %arg3: memref<1x16xf32, #tpu.memory_space<vmem>>, %arg4: memref<1x16xf32, #tpu.memory_space<vmem>>, %arg5: memref<80x16xbf16, #tpu.memory_space<vmem>>) attributes {dimension_semantics = [#tpu.dimension_semantics<parallel>], iteration_bounds = array<i64: 1>, scalar_prefetch = 0 : i64, scratch_operands = 0 : i64, tpu.core_type = #tpu.core_type<tc>, window_params = [{transform_indices = @transform_0, window_bounds = array<i64: 80, 72>}, {pipeline_mode = #tpu.pipeline_mode<synchronous>, transform_indices = @transform_1, window_bounds = array<i64: 72, 16>}, {pipeline_mode = #tpu.pipeline_mode<synchronous>, transform_indices = @transform_2, window_bounds = array<i64: 1, 16>}, {pipeline_mode = #tpu.pipeline_mode<synchronous>, transform_indices = @transform_3, window_bounds = array<i64: 1, 16>}, {transform_indices = @transform_4, window_bounds = array<i64: 80, 16>}]} {
    %c0 = arith.constant 0 : index
    %c0_0 = arith.constant 0 : index
    %0 = vector.load %arg1[%c0, %c0_0] : memref<80x72xbf16, #tpu.memory_space<vmem>>, vector<80x72xbf16>
    %c0_1 = arith.constant 0 : index
    %c0_2 = arith.constant 0 : index
    %1 = vector.load %arg2[%c0_1, %c0_2] : memref<72x16xbf16, #tpu.memory_space<vmem>>, vector<72x16xbf16>
    %cst = arith.constant dense<0.000000e+00> : vector<80x16xf32>
    %2 = tpu.matmul %0, %1, %cst {dimension_numbers = #tpu.dot_dimension_numbers<[1], [0], [0], [1], [0, 0, 1, 1], [], []>} : vector<80x72xbf16>, vector<72x16xbf16>, vector<80x16xf32> -> vector<80x16xf32>
    %c0_3 = arith.constant 0 : index
    %c0_4 = arith.constant 0 : index
    %3 = vector.load %arg3[%c0_3, %c0_4] : memref<1x16xf32, #tpu.memory_space<vmem>>, vector<1x16xf32>
    %4 = vector.broadcast %3 : vector<1x16xf32> to vector<80x16xf32>
    %5 = arith.mulf %2, %4 : vector<80x16xf32>
    %c0_5 = arith.constant 0 : index
    %c0_6 = arith.constant 0 : index
    %6 = vector.load %arg4[%c0_5, %c0_6] : memref<1x16xf32, #tpu.memory_space<vmem>>, vector<1x16xf32>
    %7 = vector.broadcast %6 : vector<1x16xf32> to vector<80x16xf32>
    %8 = arith.addf %5, %7 : vector<80x16xf32>
    %cst_7 = arith.constant 0.000000e+00 : f32
    %9 = vector.broadcast %cst_7 : f32 to vector<80x16xf32>
    %10 = arith.maximumf %8, %9 : vector<80x16xf32>
    %11 = arith.truncf %10 : vector<80x16xf32> to vector<80x16xbf16>
    %c0_8 = arith.constant 0 : index
    %c0_9 = arith.constant 0 : index
    %12 = vector.load %arg5[%c0_8, %c0_9] : memref<80x16xbf16, #tpu.memory_space<vmem>>, vector<80x16xbf16>
    tpu.vector_store %arg5[%c0_8, %c0_9], %11 {strides = array<i32>} : memref<80x16xbf16, #tpu.memory_space<vmem>>, vector<80x16xbf16>,
    return
  }
  func.func @transform_0(%arg0: i32) -> (i32, i32) {
    %c0_i32 = arith.constant 0 : i32
    %c0_i32_0 = arith.constant 0 : i32
    return %arg0, %c0_i32 : i32, i32
  }
  func.func @transform_1(%arg0: i32) -> (i32, i32) {
    %c0_i32 = arith.constant 0 : i32
    %c0_i32_0 = arith.constant 0 : i32
    %c0_i32_1 = arith.constant 0 : i32
    return %c0_i32, %c0_i32_0 : i32, i32
  }
  func.func @transform_2(%arg0: i32) -> (i32, i32) {
    %c0_i32 = arith.constant 0 : i32
    %c0_i32_0 = arith.constant 0 : i32
    %c0_i32_1 = arith.constant 0 : i32
    return %c0_i32, %c0_i32_0 : i32, i32
  }
  func.func @transform_3(%arg0: i32) -> (i32, i32) {
    %c0_i32 = arith.constant 0 : i32
    %c0_i32_0 = arith.constant 0 : i32
    %c0_i32_1 = arith.constant 0 : i32
    return %c0_i32, %c0_i32_0 : i32, i32
  }
  func.func @transform_4(%arg0: i32) -> (i32, i32) {
    %c0_i32 = arith.constant 0 : i32
    %c0_i32_0 = arith.constant 0 : i32
    return %arg0, %c0_i32 : i32, i32
  }
}

</mosaic_0001>

<llo_original>
// kernel: tpu_custom_call.1
$region0: #{tpu_custom_call.1}
  #allocation0 [shape = 'u32[]', space=smem, size = 0x4, offset = 0x4, fixed_abs, tag = 'smem constant byte address 0x4 - core index']
  #allocation1 [shape = 'u32[144,128]{1,0:T(1,128)}', space=vmem, size = 0x12000, scoped, tag = 'internal scratch']
  %s0 = inlined_call_operand.vmem [shape: bf16[80,72], index: 0, kind: input, shape index: {}]
  %s1 = inlined_call_operand.vmem [shape: bf16[72,16], index: 1, kind: input, shape index: {}]
  %s2 = inlined_call_operand.vmem [shape: f32[1,16], index: 2, kind: input, shape index: {}]
  %s3 = inlined_call_operand.vmem [shape: f32[1,16], index: 3, kind: input, shape index: {}]
  %s4 = inlined_call_operand.vmem [shape: bf16[80,16], index: 4, kind: output, shape index: {}]
  %s5 = sld [smem:[#allocation0]]
  $region26: #{tpu_custom_call.1} parent=0
    _
  %s7 = ssub.s32 1, %s5
  %s8 = scalar_select 0, %s7, %s5
  // Predicated region
  $region2: #{tpu_custom_call.1} parent=0 // pred_check
    _
  $region3: #{tpu_custom_call.1} parent=0 // pred_check_branch
    %10 = sbr.rel (0) target = $region5
  $region4: #{tpu_custom_call.1} parent=0 // pred_region
    _
  $region5: #{tpu_custom_call.1} parent=0 // pred_fallthru
    _
  // Predicated region
  $region6: #{tpu_custom_call.1} parent=0 // pred_check
    _
  $region7: #{tpu_custom_call.1} parent=0 // pred_check_branch
    %12 = sbr.rel (0) target = $region9
  $region8: #{tpu_custom_call.1} parent=0 // pred_region
    _
  $region9: #{tpu_custom_call.1} parent=0 // pred_fallthru
    _
  // Predicated region
  $region10: #{tpu_custom_call.1} parent=0 // pred_check
    _
  $region11: #{tpu_custom_call.1} parent=0 // pred_check_branch
    %14 = sbr.rel (0) target = $region13
  $region12: #{tpu_custom_call.1} parent=0 // pred_region
    _
  $region13: #{tpu_custom_call.1} parent=0 // pred_fallthru
    _
  // Predicated region
  $region14: #{tpu_custom_call.1} parent=0 // pred_check
    _
  $region15: #{tpu_custom_call.1} parent=0 // pred_check_branch
    %16 = sbr.rel (0) target = $region17
  $region16: #{tpu_custom_call.1} parent=0 // pred_region
    _
  $region17: #{tpu_custom_call.1} parent=0 // pred_fallthru
    _
  %v18 = vld [vmem:[%s0] sm:$0xf]
  %v19 = vld [vmem:[%s0 + $0x4] sm:$0xf]
  %v20 = vld [vmem:[%s0 + $0x8] sm:$0xf]
  %v21 = vld [vmem:[%s0 + $0xc] sm:$0xf]
  %v22 = vld [vmem:[%s0 + $0x10] sm:$0xf]
  %v23 = vld [vmem:[%s0 + $0x14] sm:$0xf]
  %v24 = vld [vmem:[%s0 + $0x18] sm:$0xf]
  %v25 = vld [vmem:[%s0 + $0x1c] sm:$0xf]
  %v26 = vld [vmem:[%s0 + $0x20] sm:$0xf]
  %v27 = vld [vmem:[%s0 + $0x24] sm:$0xf]
  %v28 = vld [vmem:[%s1] sm:$0xf]
  %v29 = vld [vmem:[%s1 + $0x4] sm:$0xf]
  %v30 = vld [vmem:[%s1 + $0x8] sm:$0xf]
  %v31 = vld [vmem:[%s1 + $0xc] sm:$0xf]
  %v32 = vld [vmem:[%s1 + $0x10] sm:$0xf]
  %v33 = vld [vmem:[%s1 + $0x14] sm:$0xf]
  %v34 = vld [vmem:[%s1 + $0x18] sm:$0xf]
  %v35 = vld [vmem:[%s1 + $0x1c] sm:$0xf]
  %v36 = vld [vmem:[%s1 + $0x20] sm:$0xf]
  %v47 = vunpack.c.l.b16 %v18
  %v48 = vunpack.c.l.b16 %v19
  %v49 = vunpack.c.l.b16 %v20
  %v50 = vunpack.c.l.b16 %v21
  %v51 = vunpack.c.l.b16 %v22
  %v52 = vunpack.c.l.b16 %v23
  %v53 = vunpack.c.l.b16 %v24
  %v54 = vunpack.c.l.b16 %v25
  %v55 = vunpack.c.l.b16 %v26
  %v56 = vunpack.c.l.b16 %v27
  %v57 = vpack.c.b16 %v48, %v47
  %v58 = vpack.c.b16 %v50, %v49
  %v59 = vpack.c.b16 %v52, %v51
  %v60 = vpack.c.b16 %v54, %v53
  %v61 = vpack.c.b16 %v56, %v55
  %v71 = vunpack.c.l.b16 %v28
  %v72 = vunpack.c.l.b16 %v29
  %v73 = vunpack.c.l.b16 %v30
  %v74 = vunpack.c.l.b16 %v31
  %v75 = vunpack.c.l.b16 %v32
  %v76 = vunpack.c.l.b16 %v33
  %v77 = vunpack.c.l.b16 %v34
  %v78 = vunpack.c.l.b16 %v35
  %v79 = vunpack.c.l.b16 %v36
  %v80 = vpack.c.b16 %v72, %v71
  %v81 = vpack.c.b16 %v74, %v73
  %v82 = vpack.c.b16 %v76, %v75
  %v83 = vpack.c.b16 %v78, %v77
  %v84 = vpack.c.b16 %v79, %v79
  %vm89 = vcmask 588800
  %v91 = vsel %vm89, %v57, 0
  %v94 = vsel %vm89, %v58, 0
  %v97 = vsel %vm89, %v59, 0
  %v100 = vsel %vm89, %v60, 0
  %v103 = vsel %vm89, %v61, 0
  %vm105 = vcmask 1043456
  %v107 = vsel %vm105, %v84, 0
  %109 = vmatprep.subr.bf16.mxu0 0
  %110 = vmatpush1.bf16.msra.mxu0 %v80
  %111 = vmatprep.subr.bf16.mxu0 0
  %112 = vmatpush1.bf16.msra.mxu0 %v81
  %113 = vmatprep.subr.bf16.mxu0 0
  %114 = vmatpush1.bf16.msra.mxu0 %v82
  %115 = vmatprep.subr.bf16.mxu0 0
  %116 = vmatpush1.bf16.msra.mxu0 %v83
  %117 = vmatprep.subr.bf16.mxu0 0
  %118 = vmatpush1.bf16.msra.mxu0 %v107
  %119 = vmatprep.subr.bf16.mxu0 0
  %120 = vmatpush1.bf16.msra.mxu0 0
  %121 = vmatprep.subr.bf16.mxu0 0
  %122 = vmatpush1.bf16.msra.mxu0 0
  %123 = vmatprep.subr.bf16.mxu0 0
  %124 = vmatpush1.bf16.msra.mxu0 0
  %125 = vmatprep.subr.bf16.mxu0 0
  %126 = vmatpush1.bf16.msra.mxu0 0
  %127 = vmatprep.subr.bf16.mxu0 0
  %128 = vmatpush1.bf16.msra.mxu0 0
  %129 = vmatprep.subr.bf16.mxu0 0
  %130 = vmatpush1.bf16.msra.mxu0 0
  %131 = vmatprep.subr.bf16.mxu0 0
  %132 = vmatpush1.bf16.msra.mxu0 0
  %133 = vmatprep.subr.bf16.mxu0 0
  %134 = vmatpush1.bf16.msra.mxu0 0
  %135 = vmatprep.subr.bf16.mxu0 0
  %136 = vmatpush1.bf16.msra.mxu0 0
  %137 = vmatprep.subr.bf16.mxu0 0
  %138 = vmatpush1.bf16.msra.mxu0 0
  %139 = vmatprep.subr.bf16.mxu0 0
  %140 = vmatpush1.bf16.msra.mxu0 0
  %141 = vmatprep.mubr.bf16.mxu0 0
  %142 = vmatmul.mubr.bf16.gmra.mrb[0].mxu0 %v91
  %v143 = vpop.f32.mrb[0].mxu0
  %v144 = vadd.f32 0.0, %v143
  %v145 = vpop.f32.mrb[0].mxu0
  %v146 = vpop.f32.mrb[0].mxu0
  %v147 = vadd.f32 0.0, %v146
  %v148 = vpop.f32.mrb[0].mxu0
  %149 = vmatprep.mubr.bf16.mxu0 0
  %150 = vmatmul.mubr.bf16.gmra.mrb[0].mxu0 %v94
  %v151 = vpop.f32.mrb[0].mxu0
  %v152 = vadd.f32 0.0, %v151
  %v153 = vpop.f32.mrb[0].mxu0
  %v154 = vpop.f32.mrb[0].mxu0
  %v155 = vadd.f32 0.0, %v154
  %v156 = vpop.f32.mrb[0].mxu0
  %157 = vmatprep.mubr.bf16.mxu0 0
  %158 = vmatmul.mubr.bf16.gmra.mrb[0].mxu0 %v97
  %v159 = vpop.f32.mrb[0].mxu0
  %v160 = vadd.f32 0.0, %v159
  %v161 = vpop.f32.mrb[0].mxu0
  %v162 = vpop.f32.mrb[0].mxu0
  %v163 = vadd.f32 0.0, %v162
  %v164 = vpop.f32.mrb[0].mxu0
  %165 = vmatprep.mubr.bf16.mxu0 0
  %166 = vmatmul.mubr.bf16.gmra.mrb[0].mxu0 %v100
  %v167 = vpop.f32.mrb[0].mxu0
  %v168 = vadd.f32 0.0, %v167
  %v169 = vpop.f32.mrb[0].mxu0
  %v170 = vpop.f32.mrb[0].mxu0
  %v171 = vadd.f32 0.0, %v170
  %v172 = vpop.f32.mrb[0].mxu0
  %173 = vmatprep.mubr.bf16.mxu0 0
  %174 = vmatmul.mubr.bf16.gmra.mrb[0].mxu0 %v103
  %v175 = vpop.f32.mrb[0].mxu0
  %v176 = vadd.f32 0.0, %v175
  %v177 = vpop.f32.mrb[0].mxu0
  %v178 = vpop.f32.mrb[0].mxu0
  %v179 = vadd.f32 0.0, %v178
  %v180 = vpop.f32.mrb[0].mxu0
  %181 = vdwg.mxu0
  %v182 = vld [vmem:[%s2] sm:$0x1]
  %v184 = vlaneseq
  %v185 = vshrl.u32 %v184, 7
  %v186 = vsub.s32 0, %v185
  %v187 = vrot.slane %v182, %v186
  %v189 = vmul.f32 %v144, %v187
  %v190 = vmul.f32 %v147, %v187
  %v191 = vmul.f32 %v152, %v187
  %v192 = vmul.f32 %v155, %v187
  %v193 = vmul.f32 %v160, %v187
  %v194 = vmul.f32 %v163, %v187
  %v195 = vmul.f32 %v168, %v187
  %v196 = vmul.f32 %v171, %v187
  %v197 = vmul.f32 %v176, %v187
  %v198 = vmul.f32 %v179, %v187
  %v199 = vld [vmem:[%s3] sm:$0x1]
  %v201 = vlaneseq
  %v202 = vshrl.u32 %v201, 7
  %v203 = vsub.s32 0, %v202
  %v204 = vrot.slane %v199, %v203
  %v206 = vadd.f32 %v189, %v204
  %v207 = vadd.f32 %v190, %v204
  %v208 = vadd.f32 %v191, %v204
  %v209 = vadd.f32 %v192, %v204
  %v210 = vadd.f32 %v193, %v204
  %v211 = vadd.f32 %v194, %v204
  %v212 = vadd.f32 %v195, %v204
  %v213 = vadd.f32 %v196, %v204
  %v214 = vadd.f32 %v197, %v204
  %v215 = vadd.f32 %v198, %v204
  %v216 = vmax.f32 %v206, 0.0
  %v217 = vmax.f32 %v207, 0.0
  %v218 = vmax.f32 %v208, 0.0
  %v219 = vmax.f32 %v209, 0.0
  %v220 = vmax.f32 %v210, 0.0
  %v221 = vmax.f32 %v211, 0.0
  %v222 = vmax.f32 %v212, 0.0
  %v223 = vmax.f32 %v213, 0.0
  %v224 = vmax.f32 %v214, 0.0
  %v225 = vmax.f32 %v215, 0.0
  %v226 = vpack.c.bf16 %v217, %v216
  %v227 = vpack.c.bf16 %v219, %v218
  %v228 = vpack.c.bf16 %v221, %v220
  %v229 = vpack.c.bf16 %v223, %v222
  %v230 = vpack.c.bf16 %v225, %v224
  %v236 = vunpack.c.l.b16 %v226
  %v237 = vunpack.c.h.b16 %v226
  %v238 = vunpack.c.l.b16 %v227
  %v239 = vunpack.c.h.b16 %v227
  %v240 = vunpack.c.l.b16 %v228
  %v241 = vunpack.c.h.b16 %v228
  %v242 = vunpack.c.l.b16 %v229
  %v243 = vunpack.c.h.b16 %v229
  %v244 = vunpack.c.l.b16 %v230
  %v245 = vunpack.c.h.b16 %v230
  %v246 = vpack.c.b16 %v236, %v236
  %v247 = vpack.c.b16 %v237, %v237
  %v248 = vpack.c.b16 %v238, %v238
  %v249 = vpack.c.b16 %v239, %v239
  %v250 = vpack.c.b16 %v240, %v240
  %v251 = vpack.c.b16 %v241, %v241
  %v252 = vpack.c.b16 %v242, %v242
  %v253 = vpack.c.b16 %v243, %v243
  %v254 = vpack.c.b16 %v244, %v244
  %v255 = vpack.c.b16 %v245, %v245
  %vm266 = vcmask 125952
  %267 = vst.msk [vmem:[%s4] sm:$0xf] %vm266, %v246
  %268 = vst.msk [vmem:[%s4 + $0x4] sm:$0xf] %vm266, %v247
  %269 = vst.msk [vmem:[%s4 + $0x8] sm:$0xf] %vm266, %v248
  %270 = vst.msk [vmem:[%s4 + $0xc] sm:$0xf] %vm266, %v249
  %271 = vst.msk [vmem:[%s4 + $0x10] sm:$0xf] %vm266, %v250
  %272 = vst.msk [vmem:[%s4 + $0x14] sm:$0xf] %vm266, %v251
  %273 = vst.msk [vmem:[%s4 + $0x18] sm:$0xf] %vm266, %v252
  %274 = vst.msk [vmem:[%s4 + $0x1c] sm:$0xf] %vm266, %v253
  %275 = vst.msk [vmem:[%s4 + $0x20] sm:$0xf] %vm266, %v254
  %276 = vst.msk [vmem:[%s4 + $0x24] sm:$0xf] %vm266, %v255
  // Predicated region
  $region18: #{tpu_custom_call.1} parent=0 // pred_check
    _
  $region19: #{tpu_custom_call.1} parent=0 // pred_check_branch
    %278 = sbr.rel (0) target = $region21
  $region20: #{tpu_custom_call.1} parent=0 // pred_region
    _
  $region21: #{tpu_custom_call.1} parent=0 // pred_fallthru
    _
  // Predicated region
  $region22: #{tpu_custom_call.1} parent=0 // pred_check
    _
  $region23: #{tpu_custom_call.1} parent=0 // pred_check_branch
    %280 = sbr.rel (0) target = $region25
  $region24: #{tpu_custom_call.1} parent=0 // pred_region
    _
  $region25: #{tpu_custom_call.1} parent=0 // pred_fallthru
    _

</llo_original>
